<compile_context>
chip_gen: v6e
topology: v6e:2x2x1
jax: 0.10.0
libtpu: 0.0.40
codegen_flags: <defaults>
</compile_context>

<pallas_src>
import math

import jax
import jax.numpy as jnp
from jax.experimental import pallas as pl
from jax.experimental.pallas import tpu as pltpu

_NUM_REAL_HEAD_COLS = 7  # 2 + 2 + 3 classes
_PRED_LANE = 7           # padding lane used to carry the packed argmax code


def _round_up(n, m):
    return ((n + m - 1) // m) * m


def _mlp_heads_kernel(x_ref, w1_ref, b1_ref, w2_ref, b2_ref, heads_ref):
    # hidden = x @ W1 + b1   (dropout is identity in eval mode)
    hidden = (
        jnp.dot(x_ref[...], w1_ref[...], preferred_element_type=jnp.float32)
        + b1_ref[...]
    )
    h = jnp.maximum(hidden, 0.0)

    # Fused head matmul against the lane-padded (D2, 8) head weight matrix.
    heads = (
        jnp.dot(h, w2_ref[...], preferred_element_type=jnp.float32) + b2_ref[...]
    )

    # Fused argmax over the *real* head columns only (2 / 2 / 3 classes),
    # first-index-wins on ties (matches torch.topk / jnp.argmax semantics).
    a0 = heads[:, 0:1]
    a1 = heads[:, 1:2]
    p_a = jnp.where(a1 > a0, 1.0, 0.0)

    b0 = heads[:, 2:3]
    b1_ = heads[:, 3:4]
    p_b = jnp.where(b1_ > b0, 1.0, 0.0)

    c0 = heads[:, 4:5]
    c1 = heads[:, 5:6]
    c2 = heads[:, 6:7]
    p_c = jnp.where(c1 > c0, 1.0, 0.0)
    p_c = jnp.where(c2 > jnp.maximum(c0, c1), 2.0, p_c)

    # Pack all three argmaxes into one exact small float (0..11) and store it
    # in the padding lane, so heads is the *only* output stream.
    code = p_a + 2.0 * p_b + 4.0 * p_c  # (TB, 1)

    lane = jax.lax.broadcasted_iota(jnp.int32, heads_ref.shape, 1)
    heads_ref[...] = jnp.where(lane == _PRED_LANE, code, heads).astype(
        heads_ref.dtype
    )


def linear_forward(x, params):
    """Runs the fused Linear-module forward. Returns (preds, outs)."""
    w1, b1, w2_cat, b2_cat = params  # w2_cat: (D2, 8) zero-padded, b2_cat: (1, 8)
    B, D1 = x.shape
    D2 = w1.shape[1]
    HP = w2_cat.shape[1]  # 8 (padded); real head width is 7 = 2 + 2 + 3

    # Batch tile: big enough to amortize the ~0.35us per-step overhead, small
    # enough that 2x double-buffered x + heads stays well under VMEM on all
    # generations (< 4 MiB at TB=8192, D1=D2=32).  Guarantee >= 2 grid steps
    # whenever B > 8 so both v7x TensorCores get work; the tail tile is
    # handled by Pallas edge-block masking (no pre-pad of x).
    TB_MAX = 8192
    if B <= 8:
        TB = 8
    else:
        TB = min(TB_MAX, max(8, _round_up(pl.cdiv(B, 2), 8)))
    num_tiles = pl.cdiv(B, TB)

    heads = pl.pallas_call(
        _mlp_heads_kernel,
        out_shape=jax.ShapeDtypeStruct((B, HP), jnp.float32),
        grid=(num_tiles,),
        in_specs=[
            pl.BlockSpec((TB, D1), lambda i: (i, 0)),   # x: tiled over batch
            pl.BlockSpec((D1, D2), lambda i: (0, 0)),   # W1: VMEM-resident
            pl.BlockSpec((1, D2), lambda i: (0, 0)),    # b1: VMEM-resident
            pl.BlockSpec((D2, HP), lambda i: (0, 0)),   # W2 (padded): resident
            pl.BlockSpec((1, HP), lambda i: (0, 0)),    # b2 (padded): resident
        ],
        out_specs=pl.BlockSpec((TB, HP), lambda i: (i, 0)),
        compiler_params=pltpu.CompilerParams(
            dimension_semantics=("parallel",),
            vmem_limit_bytes=32 * 1024 * 1024,
        ),
    )(x, w1, b1, w2_cat, b2_cat)

    outs = [heads[:, 0:2], heads[:, 2:4], heads[:, 4:7]]
    code = heads[:, _PRED_LANE].astype(jnp.int32)  # exact: values are 0..11
    preds = [code % 2, (code // 2) % 2, code // 4]
    return preds, outs


def init_params(key, lin_dim1, lin_dim2, head_pad=8):
    """Deterministic nn.Linear-style init: U(-1/sqrt(fan_in), 1/sqrt(fan_in)).

    Head weights/biases for the three heads (2, 2, 3 classes) are concatenated
    and zero-padded to `head_pad` lanes (8): column 7 is a pure padding lane
    that the kernel reuses to carry the packed argmax code.
    """
    ks = jax.random.split(key, 8)

    def lin_init(kw, kb, fan_in, fan_out):
        bound = 1.0 / math.sqrt(fan_in)
        w = jax.random.uniform(kw, (fan_in, fan_out), jnp.float32, -bound, bound)
        b = jax.random.uniform(kb, (1, fan_out), jnp.float32, -bound, bound)
        return w, b

    w1, b1 = lin_init(ks[0], ks[1], lin_dim1, lin_dim2)
    w2_1, b2_1 = lin_init(ks[2], ks[3], lin_dim2, 2)
    w2_2, b2_2 = lin_init(ks[4], ks[5], lin_dim2, 2)
    w2_3, b2_3 = lin_init(ks[6], ks[7], lin_dim2, 3)

    w2_cat = jnp.concatenate([w2_1, w2_2, w2_3], axis=1)  # (lin_dim2, 7)
    b2_cat = jnp.concatenate([b2_1, b2_2, b2_3], axis=1)  # (1, 7)

    h = w2_cat.shape[1]
    w2_cat = jnp.pad(w2_cat, ((0, 0), (0, head_pad - h)))  # (lin_dim2, 8)
    b2_cat = jnp.pad(b2_cat, ((0, 0), (0, head_pad - h)))  # (1, 8)
    return w1, b1, w2_cat, b2_cat


if __name__ == "__main__":
    key = jax.random.PRNGKey(0)
    k_x, k_p = jax.random.split(key)

    B, lin_dim1, lin_dim2 = 8, 32, 32
    x = jax.random.normal(k_x, (B, lin_dim1), dtype=jnp.float32)
    params = init_params(k_p, lin_dim1, lin_dim2)

    preds, outs = linear_forward(x, params)
    jax.block_until_ready(outs)
    jax.block_until_ready(preds)

    # Sanity check against a pure-JAX reference of the same forward.
    w1, b1, w2_cat, b2_cat = params
    hidden = x @ w1 + b1
    heads_ref = jnp.maximum(hidden, 0.0) @ w2_cat[:, :7] + b2_cat[:, :7]
    ref_outs = [heads_ref[:, 0:2], heads_ref[:, 2:4], heads_ref[:, 4:7]]
    for o, r in zip(outs, ref_outs):
        assert jnp.allclose(o, r, atol=1e-5, rtol=1e-5), "logits mismatch vs reference"
    ref_preds = [jnp.argmax(r, axis=-1) for r in ref_outs]
    for p, rp in zip(preds, ref_preds):
        assert jnp.array_equal(p.astype(jnp.int32), rp.astype(jnp.int32)), (
            "preds mismatch vs reference"
        )

    print("KERNEL_OK")
</pallas_src>

<mosaic_0001>
module attributes {stable_mosaic.version = 11 : i64} {
  func.func @_mlp_heads_kernel(%arg0: i32, %arg1: memref<8x32xf32, #tpu.memory_space<vmem>>, %arg2: memref<32x32xf32, #tpu.memory_space<vmem>>, %arg3: memref<1x32xf32, #tpu.memory_space<vmem>>, %arg4: memref<32x8xf32, #tpu.memory_space<vmem>>, %arg5: memref<1x8xf32, #tpu.memory_space<vmem>>, %arg6: memref<8x8xf32, #tpu.memory_space<vmem>>) attributes {dimension_semantics = [#tpu.dimension_semantics<parallel>], iteration_bounds = array<i64: 1>, scalar_prefetch = 0 : i64, scratch_operands = 0 : i64, tpu.core_type = #tpu.core_type<tc>, window_params = [{transform_indices = @transform_0, window_bounds = array<i64: 8, 32>}, {pipeline_mode = #tpu.pipeline_mode<synchronous>, transform_indices = @transform_1, window_bounds = array<i64: 32, 32>}, {pipeline_mode = #tpu.pipeline_mode<synchronous>, transform_indices = @transform_2, window_bounds = array<i64: 1, 32>}, {pipeline_mode = #tpu.pipeline_mode<synchronous>, transform_indices = @transform_3, window_bounds = array<i64: 32, 8>}, {pipeline_mode = #tpu.pipeline_mode<synchronous>, transform_indices = @transform_4, window_bounds = array<i64: 1, 8>}, {transform_indices = @transform_5, window_bounds = array<i64: 8, 8>}]} {
    %c0 = arith.constant 0 : index
    %c0_0 = arith.constant 0 : index
    %0 = vector.load %arg1[%c0, %c0_0] : memref<8x32xf32, #tpu.memory_space<vmem>>, vector<8x32xf32>
    %c0_1 = arith.constant 0 : index
    %c0_2 = arith.constant 0 : index
    %1 = vector.load %arg2[%c0_1, %c0_2] : memref<32x32xf32, #tpu.memory_space<vmem>>, vector<32x32xf32>
    %cst = arith.constant dense<0.000000e+00> : vector<8x32xf32>
    %2 = tpu.matmul %0, %1, %cst {dimension_numbers = #tpu.dot_dimension_numbers<[1], [0], [0], [1], [0, 0, 1, 1], [], []>} : vector<8x32xf32>, vector<32x32xf32>, vector<8x32xf32> -> vector<8x32xf32>
    %c0_3 = arith.constant 0 : index
    %c0_4 = arith.constant 0 : index
    %3 = vector.load %arg3[%c0_3, %c0_4] : memref<1x32xf32, #tpu.memory_space<vmem>>, vector<1x32xf32>
    %4 = vector.broadcast %3 : vector<1x32xf32> to vector<8x32xf32>
    %5 = arith.addf %2, %4 : vector<8x32xf32>
    %cst_5 = arith.constant 0.000000e+00 : f32
    %6 = vector.broadcast %cst_5 : f32 to vector<8x32xf32>
    %7 = arith.maximumf %5, %6 : vector<8x32xf32>
    %c0_6 = arith.constant 0 : index
    %c0_7 = arith.constant 0 : index
    %8 = vector.load %arg4[%c0_6, %c0_7] : memref<32x8xf32, #tpu.memory_space<vmem>>, vector<32x8xf32>
    %cst_8 = arith.constant dense<0.000000e+00> : vector<8x8xf32>
    %9 = tpu.matmul %7, %8, %cst_8 {dimension_numbers = #tpu.dot_dimension_numbers<[1], [0], [0], [1], [0, 0, 1, 1], [], []>} : vector<8x32xf32>, vector<32x8xf32>, vector<8x8xf32> -> vector<8x8xf32>
    %c0_9 = arith.constant 0 : index
    %c0_10 = arith.constant 0 : index
    %10 = vector.load %arg5[%c0_9, %c0_10] : memref<1x8xf32, #tpu.memory_space<vmem>>, vector<1x8xf32>
    %11 = vector.broadcast %10 : vector<1x8xf32> to vector<8x8xf32>
    %12 = arith.addf %9, %11 : vector<8x8xf32>
    %13 = vector.extract_strided_slice %12 {offsets = [0, 0], sizes = [8, 1], strides = [1, 1]} : vector<8x8xf32> to vector<8x1xf32>
    %14 = vector.extract_strided_slice %12 {offsets = [0, 1], sizes = [8, 1], strides = [1, 1]} : vector<8x8xf32> to vector<8x1xf32>
    %15 = arith.cmpf ogt, %14, %13 : vector<8x1xf32>
    %cst_11 = arith.constant 1.000000e+00 : f32
    %cst_12 = arith.constant 0.000000e+00 : f32
    %16 = vector.broadcast %cst_11 : f32 to vector<8x1xf32>
    %17 = vector.broadcast %cst_12 : f32 to vector<8x1xf32>
    %18 = arith.select %15, %16, %17 : vector<8x1xi1>, vector<8x1xf32>
    %19 = vector.extract_strided_slice %12 {offsets = [0, 2], sizes = [8, 1], strides = [1, 1]} : vector<8x8xf32> to vector<8x1xf32>
    %20 = vector.extract_strided_slice %12 {offsets = [0, 3], sizes = [8, 1], strides = [1, 1]} : vector<8x8xf32> to vector<8x1xf32>
    %21 = arith.cmpf ogt, %20, %19 : vector<8x1xf32>
    %cst_13 = arith.constant 1.000000e+00 : f32
    %cst_14 = arith.constant 0.000000e+00 : f32
    %22 = vector.broadcast %cst_13 : f32 to vector<8x1xf32>
    %23 = vector.broadcast %cst_14 : f32 to vector<8x1xf32>
    %24 = arith.select %21, %22, %23 : vector<8x1xi1>, vector<8x1xf32>
    %25 = vector.extract_strided_slice %12 {offsets = [0, 4], sizes = [8, 1], strides = [1, 1]} : vector<8x8xf32> to vector<8x1xf32>
    %26 = vector.extract_strided_slice %12 {offsets = [0, 5], sizes = [8, 1], strides = [1, 1]} : vector<8x8xf32> to vector<8x1xf32>
    %27 = vector.extract_strided_slice %12 {offsets = [0, 6], sizes = [8, 1], strides = [1, 1]} : vector<8x8xf32> to vector<8x1xf32>
    %28 = arith.cmpf ogt, %26, %25 : vector<8x1xf32>
    %cst_15 = arith.constant 1.000000e+00 : f32
    %cst_16 = arith.constant 0.000000e+00 : f32
    %29 = vector.broadcast %cst_15 : f32 to vector<8x1xf32>
    %30 = vector.broadcast %cst_16 : f32 to vector<8x1xf32>
    %31 = arith.select %28, %29, %30 : vector<8x1xi1>, vector<8x1xf32>
    %32 = arith.maximumf %25, %26 : vector<8x1xf32>
    %33 = arith.cmpf ogt, %27, %32 : vector<8x1xf32>
    %cst_17 = arith.constant 2.000000e+00 : f32
    %34 = vector.broadcast %cst_17 : f32 to vector<8x1xf32>
    %35 = arith.select %33, %34, %31 : vector<8x1xi1>, vector<8x1xf32>
    %cst_18 = arith.constant 2.000000e+00 : f32
    %36 = vector.broadcast %cst_18 : f32 to vector<8x1xf32>
    %37 = arith.mulf %36, %24 : vector<8x1xf32>
    %38 = arith.addf %18, %37 : vector<8x1xf32>
    %cst_19 = arith.constant 4.000000e+00 : f32
    %39 = vector.broadcast %cst_19 : f32 to vector<8x1xf32>
    %40 = arith.mulf %39, %35 : vector<8x1xf32>
    %41 = arith.addf %38, %40 : vector<8x1xf32>
    %42 = tpu.iota {dimensions = array<i32: 1>} : vector<8x8xi32>
    %c7_i32 = arith.constant 7 : i32
    %43 = vector.broadcast %c7_i32 : i32 to vector<8x8xi32>
    %44 = arith.cmpi eq, %42, %43 : vector<8x8xi32>
    %45 = vector.shape_cast %41 : vector<8x1xf32> to vector<8x1xf32>
    %46 = vector.broadcast %45 : vector<8x1xf32> to vector<8x8xf32>
    %47 = arith.select %44, %46, %12 : vector<8x8xi1>, vector<8x8xf32>
    %c0_20 = arith.constant 0 : index
    %c0_21 = arith.constant 0 : index
    %48 = vector.load %arg6[%c0_20, %c0_21] : memref<8x8xf32, #tpu.memory_space<vmem>>, vector<8x8xf32>
    tpu.vector_store %arg6[%c0_20, %c0_21], %47 {strides = array<i32>} : memref<8x8xf32, #tpu.memory_space<vmem>>, vector<8x8xf32>,
    return
  }
  func.func @transform_0(%arg0: i32) -> (i32, i32) {
    %c0_i32 = arith.constant 0 : i32
    %c0_i32_0 = arith.constant 0 : i32
    return %arg0, %c0_i32 : i32, i32
  }
  func.func @transform_1(%arg0: i32) -> (i32, i32) {
    %c0_i32 = arith.constant 0 : i32
    %c0_i32_0 = arith.constant 0 : i32
    %c0_i32_1 = arith.constant 0 : i32
    return %c0_i32, %c0_i32_0 : i32, i32
  }
  func.func @transform_2(%arg0: i32) -> (i32, i32) {
    %c0_i32 = arith.constant 0 : i32
    %c0_i32_0 = arith.constant 0 : i32
    %c0_i32_1 = arith.constant 0 : i32
    return %c0_i32, %c0_i32_0 : i32, i32
  }
  func.func @transform_3(%arg0: i32) -> (i32, i32) {
    %c0_i32 = arith.constant 0 : i32
    %c0_i32_0 = arith.constant 0 : i32
    %c0_i32_1 = arith.constant 0 : i32
    return %c0_i32, %c0_i32_0 : i32, i32
  }
  func.func @transform_4(%arg0: i32) -> (i32, i32) {
    %c0_i32 = arith.constant 0 : i32
    %c0_i32_0 = arith.constant 0 : i32
    %c0_i32_1 = arith.constant 0 : i32
    return %c0_i32, %c0_i32_0 : i32, i32
  }
  func.func @transform_5(%arg0: i32) -> (i32, i32) {
    %c0_i32 = arith.constant 0 : i32
    %c0_i32_0 = arith.constant 0 : i32
    return %arg0, %c0_i32 : i32, i32
  }
}

</mosaic_0001>

<llo_original>
// kernel: tpu_custom_call.1
$region0: #{tpu_custom_call.1}
  #allocation0 [shape = 'u32[]', space=smem, size = 0x4, offset = 0x4, fixed_abs, tag = 'smem constant byte address 0x4 - core index']
  #allocation1 [shape = 'u32[144,128]{1,0:T(1,128)}', space=vmem, size = 0x12000, scoped, tag = 'internal scratch']
  %s0 = inlined_call_operand.vmem [shape: f32[8,32], index: 0, kind: input, shape index: {}]
  %s1 = inlined_call_operand.vmem [shape: f32[32,32], index: 1, kind: input, shape index: {}]
  %s2 = inlined_call_operand.vmem [shape: f32[1,32], index: 2, kind: input, shape index: {}]
  %s3 = inlined_call_operand.vmem [shape: f32[32,8], index: 3, kind: input, shape index: {}]
  %s4 = inlined_call_operand.vmem [shape: f32[1,8], index: 4, kind: input, shape index: {}]
  %s5 = inlined_call_operand.hbm [shape: f32[8,8], index: 5, kind: output, shape index: {}]
  %s6 = sld [smem:[#allocation0]]
  $region30: #{tpu_custom_call.1} parent=0
    _
  %s8 = ssub.s32 1, %s6
  %s9 = scalar_select 0, %s8, %s6
  $region1: #{tpu_custom_call.1} parent=0
    #allocation2 [shape = 'u8[4096]{0}', space=vmem, size = 0x1000, scoped, tag = 'output window, operand 0, single buffered']
    #allocation3 [shape = 's32[1]{0}', space=sflag, size = 0x4, scoped, tag = 'scoped memory for tpu_custom_call.1']
    %10 = vsyncpa [#allocation3], 0
    // Predicated region
    $region2: #{tpu_custom_call.1} parent=1 // pred_check
      _
    $region3: #{tpu_custom_call.1} parent=1 // pred_check_branch
      %12 = sbr.rel (0) target = $region5
    $region4: #{tpu_custom_call.1} parent=1 // pred_region
      _
    $region5: #{tpu_custom_call.1} parent=1 // pred_fallthru
      _
    // Predicated region
    $region6: #{tpu_custom_call.1} parent=1 // pred_check
      _
    $region7: #{tpu_custom_call.1} parent=1 // pred_check_branch
      %14 = sbr.rel (0) target = $region9
    $region8: #{tpu_custom_call.1} parent=1 // pred_region
      _
    $region9: #{tpu_custom_call.1} parent=1 // pred_fallthru
      _
    // Predicated region
    $region10: #{tpu_custom_call.1} parent=1 // pred_check
      _
    $region11: #{tpu_custom_call.1} parent=1 // pred_check_branch
      %16 = sbr.rel (0) target = $region13
    $region12: #{tpu_custom_call.1} parent=1 // pred_region
      _
    $region13: #{tpu_custom_call.1} parent=1 // pred_fallthru
      _
    // Predicated region
    $region14: #{tpu_custom_call.1} parent=1 // pred_check
      _
    $region15: #{tpu_custom_call.1} parent=1 // pred_check_branch
      %18 = sbr.rel (0) target = $region17
    $region16: #{tpu_custom_call.1} parent=1 // pred_region
      _
    $region17: #{tpu_custom_call.1} parent=1 // pred_fallthru
      _
    // Predicated region
    $region18: #{tpu_custom_call.1} parent=1 // pred_check
      _
    $region19: #{tpu_custom_call.1} parent=1 // pred_check_branch
      %20 = sbr.rel (0) target = $region21
    $region20: #{tpu_custom_call.1} parent=1 // pred_region
      _
    $region21: #{tpu_custom_call.1} parent=1 // pred_fallthru
      _
    %v21 = vld [vmem:[%s0] sm:$0xff]
    %v22 = vld [vmem:[%s1] sm:$0xff]
    %v23 = vld [vmem:[%s1 + $0x8] sm:$0xff]
    %v24 = vld [vmem:[%s1 + $0x10] sm:$0xff]
    %v25 = vld [vmem:[%s1 + $0x18] sm:$0xff]
    %v26 = vld [vmem:[%s2] sm:$0x1]
    %v28 = vlaneseq
    %v29 = vshrl.u32 %v28, 7
    %v30 = vsub.s32 0, %v29
    %v31 = vrot.slane %v26, %v30
    %vm33 = vcmask 261120
    %v35 = vsel %vm33, %v21, 0
    %37 = vmatprep.subr.mxu0 0.0
    %38 = vmatpush1.msra.mxu0 0.0
    %39 = vmatprep.subr.mxu0 0.0
    %40 = vmatpush1.msra.mxu0 0.0
    %41 = vmatprep.subr.mxu0 0.0
    %42 = vmatpush1.msra.mxu0 0.0
    %43 = vmatprep.subr.mxu0 0.0
    %44 = vmatpush1.msra.mxu0 0.0
    %45 = vmatprep.subr.mxu0 0.0
    %46 = vmatpush1.msra.mxu0 0.0
    %47 = vmatprep.subr.mxu0 0.0
    %48 = vmatpush1.msra.mxu0 0.0
    %49 = vmatprep.subr.mxu0 0.0
    %50 = vmatpush1.msra.mxu0 0.0
    %51 = vmatprep.subr.mxu0 0.0
    %52 = vmatpush1.msra.mxu0 0.0
    %53 = vmatprep.subr.mxu0 0.0
    %54 = vmatpush1.msra.mxu0 0.0
    %55 = vmatprep.subr.mxu0 0.0
    %56 = vmatpush1.msra.mxu0 0.0
    %57 = vmatprep.subr.mxu0 0.0
    %58 = vmatpush1.msra.mxu0 0.0
    %59 = vmatprep.subr.mxu0 0.0
    %60 = vmatpush1.msra.mxu0 0.0
    %61 = vmatprep.subr.mxu0 0.0
    %62 = vmatpush1.msra.mxu0 %v25
    %63 = vmatprep.subr.mxu0 0.0
    %64 = vmatpush1.msra.mxu0 %v24
    %65 = vmatprep.subr.mxu0 0.0
    %66 = vmatpush1.msra.mxu0 %v23
    %67 = vmatprep.subr.mxu0 0.0
    %68 = vmatpush1.msra.mxu0 %v22
    %69 = vmatprep.subr.mxu0 0.0
    %70 = vmatpush2.msra.mxu0 0.0
    %71 = vmatprep.subr.mxu0 0.0
    %72 = vmatpush2.msra.mxu0 0.0
    %73 = vmatprep.subr.mxu0 0.0
    %74 = vmatpush2.msra.mxu0 0.0
    %75 = vmatprep.subr.mxu0 0.0
    %76 = vmatpush2.msra.mxu0 0.0
    %77 = vmatprep.subr.mxu0 0.0
    %78 = vmatpush2.msra.mxu0 0.0
    %79 = vmatprep.subr.mxu0 0.0
    %80 = vmatpush2.msra.mxu0 0.0
    %81 = vmatprep.subr.mxu0 0.0
    %82 = vmatpush2.msra.mxu0 0.0
    %83 = vmatprep.subr.mxu0 0.0
    %84 = vmatpush2.msra.mxu0 0.0
    %85 = vmatprep.subr.mxu0 0.0
    %86 = vmatpush2.msra.mxu0 0.0
    %87 = vmatprep.subr.mxu0 0.0
    %88 = vmatpush2.msra.mxu0 0.0
    %89 = vmatprep.subr.mxu0 0.0
    %90 = vmatpush2.msra.mxu0 0.0
    %91 = vmatprep.subr.mxu0 0.0
    %92 = vmatpush2.msra.mxu0 0.0
    %93 = vmatprep.subr.mxu0 0.0
    %94 = vmatpush2.msra.mxu0 0.0
    %95 = vmatprep.subr.mxu0 0.0
    %96 = vmatpush2.msra.mxu0 0.0
    %97 = vmatprep.subr.mxu0 0.0
    %98 = vmatpush2.msra.mxu0 0.0
    %99 = vmatprep.subr.mxu0 0.0
    %100 = vmatpush2.msra.mxu0 0.0
    %101 = vmatprep.mubr.f32.mxu0 0.0
    %102 = vmatmul.mubr.f32.gmra.mxu0 %v35
    %v103 = vpop.f32.mrf.mxu0
    %v104 = vadd.f32 %v31, %v103
    %v105 = vpop.f32.mrf.mxu0
    %106 = vdwg.mxu0
    %v107 = vmax.f32 %v104, 0.0
    %v108 = vld [vmem:[%s3] sm:$0xff]
    %v109 = vld [vmem:[%s3 + $0x8] sm:$0xff]
    %v110 = vld [vmem:[%s3 + $0x10] sm:$0xff]
    %v111 = vld [vmem:[%s3 + $0x18] sm:$0xff]
    %v112 = vld [vmem:[%s4] sm:$0x1]
    %v114 = vlaneseq
    %v115 = vshrl.u32 %v114, 7
    %v116 = vsub.s32 0, %v115
    %v117 = vrot.slane %v112, %v116
    %v120 = vsel %vm33, %v107, 0
    %122 = vmatprep.subr.mxu0 0.0
    %123 = vmatpush1.msra.mxu0 0.0
    %124 = vmatprep.subr.mxu0 0.0
    %125 = vmatpush1.msra.mxu0 0.0
    %126 = vmatprep.subr.mxu0 0.0
    %127 = vmatpush1.msra.mxu0 0.0
    %128 = vmatprep.subr.mxu0 0.0
    %129 = vmatpush1.msra.mxu0 0.0
    %130 = vmatprep.subr.mxu0 0.0
    %131 = vmatpush1.msra.mxu0 0.0
    %132 = vmatprep.subr.mxu0 0.0
    %133 = vmatpush1.msra.mxu0 0.0
    %134 = vmatprep.subr.mxu0 0.0
    %135 = vmatpush1.msra.mxu0 0.0
    %136 = vmatprep.subr.mxu0 0.0
    %137 = vmatpush1.msra.mxu0 0.0
    %138 = vmatprep.subr.mxu0 0.0
    %139 = vmatpush1.msra.mxu0 0.0
    %140 = vmatprep.subr.mxu0 0.0
    %141 = vmatpush1.msra.mxu0 0.0
    %142 = vmatprep.subr.mxu0 0.0
    %143 = vmatpush1.msra.mxu0 0.0
    %144 = vmatprep.subr.mxu0 0.0
    %145 = vmatpush1.msra.mxu0 0.0
    %146 = vmatprep.subr.mxu0 0.0
    %147 = vmatpush1.msra.mxu0 %v111
    %148 = vmatprep.subr.mxu0 0.0
    %149 = vmatpush1.msra.mxu0 %v110
    %150 = vmatprep.subr.mxu0 0.0
    %151 = vmatpush1.msra.mxu0 %v109
    %152 = vmatprep.subr.mxu0 0.0
    %153 = vmatpush1.msra.mxu0 %v108
    %154 = vmatprep.subr.mxu0 0.0
    %155 = vmatpush2.msra.mxu0 0.0
    %156 = vmatprep.subr.mxu0 0.0
    %157 = vmatpush2.msra.mxu0 0.0
    %158 = vmatprep.subr.mxu0 0.0
    %159 = vmatpush2.msra.mxu0 0.0
    %160 = vmatprep.subr.mxu0 0.0
    %161 = vmatpush2.msra.mxu0 0.0
    %162 = vmatprep.subr.mxu0 0.0
    %163 = vmatpush2.msra.mxu0 0.0
    %164 = vmatprep.subr.mxu0 0.0
    %165 = vmatpush2.msra.mxu0 0.0
    %166 = vmatprep.subr.mxu0 0.0
    %167 = vmatpush2.msra.mxu0 0.0
    %168 = vmatprep.subr.mxu0 0.0
    %169 = vmatpush2.msra.mxu0 0.0
    %170 = vmatprep.subr.mxu0 0.0
    %171 = vmatpush2.msra.mxu0 0.0
    %172 = vmatprep.subr.mxu0 0.0
    %173 = vmatpush2.msra.mxu0 0.0
    %174 = vmatprep.subr.mxu0 0.0
    %175 = vmatpush2.msra.mxu0 0.0
    %176 = vmatprep.subr.mxu0 0.0
    %177 = vmatpush2.msra.mxu0 0.0
    %178 = vmatprep.subr.mxu0 0.0
    %179 = vmatpush2.msra.mxu0 0.0
    %180 = vmatprep.subr.mxu0 0.0
    %181 = vmatpush2.msra.mxu0 0.0
    %182 = vmatprep.subr.mxu0 0.0
    %183 = vmatpush2.msra.mxu0 0.0
    %184 = vmatprep.subr.mxu0 0.0
    %185 = vmatpush2.msra.mxu0 0.0
    %186 = vmatprep.mubr.f32.mxu0 0.0
    %187 = vmatmul.mubr.f32.gmra.mxu0 %v120
    %v188 = vpop.f32.mrf.mxu0
    %v189 = vadd.f32 %v117, %v188
    %v190 = vpop.f32.mrf.mxu0
    %191 = vdwg.mxu0
    %193 = vrot.lane.b32.xlu0 %v189, 1
    %v194 = vpop.permute.xlu0 %193
    %vm196 = vcmp.gt.f32.partialorder %v189, %v194
    %v197 = vsel %vm196, 1.0, 0.0
    %198 = vrot.lane.b32.xlu0 %v189, 127
    %v199 = vpop.permute.xlu0 %198
    %v201 = vmax.f32 %v189, %v199
    %203 = vrot.lane.b32.xlu0 %v201, 2
    %v204 = vpop.permute.xlu0 %203
    %vm206 = vcmp.gt.f32.partialorder %v189, %v204
    %208 = vrot.lane.b32.xlu0 %v197, 1
    %v209 = vpop.permute.xlu0 %208
    %v211 = vsel %vm206, 2.0, %v209
    %v212 = vmul.f32 %v197, 2.0
    %214 = vrot.lane.b32.xlu0 %v212, 126
    %v215 = vpop.permute.xlu0 %214
    %v217 = vadd.f32 %v197, %v215
    %v218 = vmul.f32 %v211, 4.0
    %220 = vrot.lane.b32.xlu0 %v218, 123
    %v221 = vpop.permute.xlu0 %220
    %v223 = vadd.f32 %v217, %v221
    %v224 = vlaneseq
    %v225 = vand.u32 %v224, 127
    %vm226 = vcmp.eq.s32.totalorder %v225, 7
    %228 = vset.pattern.permute.xlu0 1
    %229 = vperm.xlu0 %228, %v223
    %v230 = vpop.permute.xlu0 %229
    %v232 = vsel %vm226, %v230, %v189
    %vm233 = vcmask 64512
    %234 = vst.msk [vmem:[#allocation2] sm:$0xff] %vm233, %v232
    // Predicated region
    $region22: #{tpu_custom_call.1} parent=1 // pred_check
      _
    $region23: #{tpu_custom_call.1} parent=1 // pred_check_branch
      %236 = sbr.rel (0) target = $region25
    $region24: #{tpu_custom_call.1} parent=1 // pred_region
      %s238 = ssub.s32 128, 128
      %239 = vsyncadd [#allocation3], %s238
      %s241 = sshll.u32 [#allocation2], 4
      %s242 = int_to_ptr.vmem [resolvable:$true] %s241
      %244 = dma.vmem_to_hbm [thread:$0]  %s242, 128, %s5, [#allocation3]
    $region25: #{tpu_custom_call.1} parent=1 // pred_fallthru
      _
    // Predicated region
    $region26: #{tpu_custom_call.1} parent=1 // pred_check
      _
    $region27: #{tpu_custom_call.1} parent=1 // pred_check_branch
      %246 = sbr.rel (0) target = $region29
    $region28: #{tpu_custom_call.1} parent=1 // pred_region
      %247 = dma.done [#allocation3], 128
    $region29: #{tpu_custom_call.1} parent=1 // pred_fallthru
      _
    %248 = vsyncpa [#allocation3], 1

</llo_original>
